<compile_context>
chip_gen: v7x
topology: tpu7x:2x2x1
jax: 0.10.0
libtpu: 0.0.40
codegen_flags: <defaults>
</compile_context>

<pallas_src>
import functools

import jax
import jax.numpy as jnp
from jax.experimental import pallas as pl
from jax.experimental.pallas import tpu as pltpu


# ----------------------------------------------------------------------------
# Pallas kernel: fused concat + affine normalization
#   y_k = x_k * scale_k + bias_k   (lane-0 aligned per-piece FMA)
#   out = concat(y_0 .. y_{K-1})   (single full-width lane-dense store)
# ----------------------------------------------------------------------------
def _fused_norm_kernel(*refs, n_pieces):
    x_refs = refs[:n_pieces]
    s_refs = refs[n_pieces:2 * n_pieces]
    b_refs = refs[2 * n_pieces:3 * n_pieces]
    o_ref = refs[3 * n_pieces]

    ys = []
    for x_ref, s_ref, b_ref in zip(x_refs, s_refs, b_refs):
        x = x_ref[...].astype(jnp.float32)            # (tb, m_k)
        ys.append(x * s_ref[...] + b_ref[...])        # (1, m_k) broadcast
    out = ys[0] if n_pieces == 1 else jnp.concatenate(ys, axis=-1)
    o_ref[...] = out.astype(o_ref.dtype)              # one unmasked full store


def _round_up8(x):
    return ((x + 7) // 8) * 8


def _choose_tb(B, widths, in_itemsizes, out_itemsize, budget_bytes):
    """Batch-tile rows from a VMEM budget (double-buffered in + out)."""
    per_row = 2 * (sum(m * s for m, s in zip(widths, in_itemsizes))
                   + sum(widths) * out_itemsize)
    tb = int(budget_bytes // max(per_row, 1))
    # Guarantee >=2 (prefer >=4) grid blocks when B is big enough so the
    # "parallel" axis can shard across v7x's two TensorCores.
    min_blocks = 4 if B >= 32 else (2 if B >= 16 else 1)
    if min_blocks > 1:
        tb = min(tb, _round_up8((B + min_blocks - 1) // min_blocks))
    if B <= 8 or tb >= B:
        return B                      # single full-extent block (always legal)
    return max(8, (tb // 8) * 8)      # rows a multiple of 8 (sublane tiling)


def _fused_normalize_pallas(pieces, scale_pieces, bias_pieces, *,
                            out_dtype=jnp.float32,
                            vmem_budget_bytes=8 << 20):
    """pieces: list of (B, m_i) arrays (sorted by key); returns (B, M)."""
    B = int(pieces[0].shape[0])
    widths = tuple(int(p.shape[-1]) for p in pieces)
    M = sum(widths)
    n_pieces = len(pieces)

    in_itemsizes = [jnp.dtype(p.dtype).itemsize for p in pieces]
    out_itemsize = jnp.dtype(out_dtype).itemsize
    tb = _choose_tb(B, widths, in_itemsizes, out_itemsize, vmem_budget_bytes)
    grid = (pl.cdiv(B, tb),)

    kernel = functools.partial(_fused_norm_kernel, n_pieces=n_pieces)

    in_specs = [pl.BlockSpec((tb, m), lambda i: (i, 0)) for m in widths]
    in_specs += [pl.BlockSpec((1, m), lambda i: (0, 0)) for m in widths]   # scale
    in_specs += [pl.BlockSpec((1, m), lambda i: (0, 0)) for m in widths]   # bias

    bytes_accessed = (sum(B * m * s for m, s in zip(widths, in_itemsizes))
                      + B * M * out_itemsize
                      + 2 * 4 * M)                     # scale + bias
    cost = pl.CostEstimate(flops=2 * B * M, transcendentals=0,
                           bytes_accessed=bytes_accessed)

    return pl.pallas_call(
        kernel,
        out_shape=jax.ShapeDtypeStruct((B, M), out_dtype),
        grid_spec=pltpu.PrefetchScalarGridSpec(
            num_scalar_prefetch=0,
            grid=grid,
            in_specs=in_specs,
            out_specs=pl.BlockSpec((tb, M), lambda i: (i, 0)),
        ),
        compiler_params=pltpu.CompilerParams(
            # Independent batch tiles -> megacore sharding on v7x.
            dimension_semantics=("parallel",),
            # Safe on all generations (v5e raises from 16 MiB default;
            # v7x physical is 64 MiB so 32 MiB leaves headroom).
            vmem_limit_bytes=32 * 1024 * 1024),
        cost_estimate=cost,
    )(*pieces, *scale_pieces, *bias_pieces)


# ----------------------------------------------------------------------------
# DefaultHead (eval-mode forward) in JAX, hot path fully in Pallas
# ----------------------------------------------------------------------------
class DefaultHeadPallas:
    def __init__(self, obs_shapes, online_norm=True, obs_transform=None,
                 epsilon=1e-10, seed=0, out_dtype=jnp.float32):
        self.obs_transform = obs_transform
        self.obs_shapes = dict(obs_shapes)
        self._keys = sorted(self.obs_shapes.keys())
        self._widths = [int(self.obs_shapes[k][0]) for k in self._keys]
        self.n_features = sum(self._widths)
        self.online_norm = online_norm
        self.epsilon = float(epsilon)
        self.out_dtype = out_dtype

        # OnlineNormalizationLayer buffers (synthetic accumulated statistics so
        # the normalization is non-trivial). n is a Python int (no host sync).
        key = jax.random.PRNGKey(seed)
        k_mean, k_m2 = jax.random.split(key)
        self.n = 100
        self._mean = jax.random.normal(k_mean, (self.n_features,), jnp.float32)
        self._M2 = jax.random.uniform(k_m2, (self.n_features,), jnp.float32,
                                      minval=0.5, maxval=5.0) * float(self.n - 1)

        # var / scale / bias precomputed once (hoisted off the hot path).
        if self.n > 1:
            self.var = self._M2 / float(self.n - 1)
        else:
            self.var = jnp.zeros_like(self._M2)
        self._scale = 1.0 / jnp.sqrt(self.var + self.epsilon)   # (M,)
        self._bias = -self._mean * self._scale                  # (M,)

        # Pre-split scale/bias into per-piece (1, m_k) arrays so every kernel
        # operand is lane-0 aligned (no in-kernel lane-offset slices).
        self._scale_pieces, self._bias_pieces = [], []
        off = 0
        for m in self._widths:
            self._scale_pieces.append(self._scale[off:off + m].reshape(1, m))
            self._bias_pieces.append(self._bias[off:off + m].reshape(1, m))
            off += m

    def __call__(self, obs):
        if self.obs_transform is not None:
            obs = self.obs_transform(obs)
        pieces = [obs[k] for k in self._keys]
        if not self.online_norm:
            return jnp.concatenate(pieces, axis=-1)
        # Fused concat + normalize; no wrapper-side concatenate / astype.
        return _fused_normalize_pallas(pieces, self._scale_pieces,
                                       self._bias_pieces,
                                       out_dtype=self.out_dtype)


# ----------------------------------------------------------------------------
# Pure-JAX reference for correctness checking
# ----------------------------------------------------------------------------
def _reference_forward(head, obs):
    f = jnp.concatenate([obs[k] for k in sorted(obs.keys())], axis=-1)
    std = jnp.sqrt(head.var + head.epsilon)
    return (f - head._mean) / std


def _make_obs(obs_shapes, batch, seed):
    keys = jax.random.split(jax.random.PRNGKey(seed), len(obs_shapes))
    return {
        k: jax.random.normal(kk, (batch,) + obs_shapes[k], jnp.float32)
        for k, kk in zip(sorted(obs_shapes.keys()), keys)
    }


if __name__ == "__main__":
    # --- test 1: small shapes consistent with the module (B=2, M=16) --------
    obs_shapes1 = {"a": (3,), "b": (5,), "c": (8,)}   # n_features = 16
    head1 = DefaultHeadPallas(obs_shapes1, online_norm=True, seed=0)
    obs1 = _make_obs(obs_shapes1, batch=2, seed=0)

    out1 = jax.block_until_ready(head1(obs1))
    ref1 = _reference_forward(head1, obs1)
    assert out1.shape == (2, head1.n_features), out1.shape
    assert jnp.allclose(out1, ref1, rtol=1e-5, atol=1e-5), \
        f"max abs err = {jnp.max(jnp.abs(out1 - ref1))}"

    # --- test 2: larger shapes that exercise batch tiling (grid >= 4) -------
    obs_shapes2 = {"x": (128,), "y": (256,), "z": (64,)}   # n_features = 448
    head2 = DefaultHeadPallas(obs_shapes2, online_norm=True, seed=1)
    obs2 = _make_obs(obs_shapes2, batch=256, seed=1)

    out2 = jax.block_until_ready(head2(obs2))
    ref2 = _reference_forward(head2, obs2)
    assert out2.shape == (256, head2.n_features), out2.shape
    assert jnp.allclose(out2, ref2, rtol=1e-5, atol=1e-5), \
        f"max abs err = {jnp.max(jnp.abs(out2 - ref2))}"

    print("KERNEL_OK")
</pallas_src>

<mosaic_0001>
module attributes {stable_mosaic.version = 11 : i64} {
  func.func @_fused_norm_kernel(%arg0: i32, %arg1: memref<2x3xf32, #tpu.memory_space<vmem>>, %arg2: memref<2x5xf32, #tpu.memory_space<vmem>>, %arg3: memref<2x8xf32, #tpu.memory_space<vmem>>, %arg4: memref<1x3xf32, #tpu.memory_space<vmem>>, %arg5: memref<1x5xf32, #tpu.memory_space<vmem>>, %arg6: memref<1x8xf32, #tpu.memory_space<vmem>>, %arg7: memref<1x3xf32, #tpu.memory_space<vmem>>, %arg8: memref<1x5xf32, #tpu.memory_space<vmem>>, %arg9: memref<1x8xf32, #tpu.memory_space<vmem>>, %arg10: memref<2x16xf32, #tpu.memory_space<vmem>>) attributes {dimension_semantics = [#tpu.dimension_semantics<parallel>], iteration_bounds = array<i64: 1>, scalar_prefetch = 0 : i64, scratch_operands = 0 : i64, tpu.core_type = #tpu.core_type<tc>, window_params = [{transform_indices = @transform_0, window_bounds = array<i64: 2, 3>}, {transform_indices = @transform_1, window_bounds = array<i64: 2, 5>}, {transform_indices = @transform_2, window_bounds = array<i64: 2, 8>}, {pipeline_mode = #tpu.pipeline_mode<synchronous>, transform_indices = @transform_3, window_bounds = array<i64: 1, 3>}, {pipeline_mode = #tpu.pipeline_mode<synchronous>, transform_indices = @transform_4, window_bounds = array<i64: 1, 5>}, {pipeline_mode = #tpu.pipeline_mode<synchronous>, transform_indices = @transform_5, window_bounds = array<i64: 1, 8>}, {pipeline_mode = #tpu.pipeline_mode<synchronous>, transform_indices = @transform_6, window_bounds = array<i64: 1, 3>}, {pipeline_mode = #tpu.pipeline_mode<synchronous>, transform_indices = @transform_7, window_bounds = array<i64: 1, 5>}, {pipeline_mode = #tpu.pipeline_mode<synchronous>, transform_indices = @transform_8, window_bounds = array<i64: 1, 8>}, {transform_indices = @transform_9, window_bounds = array<i64: 2, 16>}]} {
    %c0 = arith.constant 0 : index
    %c0_0 = arith.constant 0 : index
    %0 = vector.load %arg1[%c0, %c0_0] : memref<2x3xf32, #tpu.memory_space<vmem>>, vector<2x3xf32>
    %c0_1 = arith.constant 0 : index
    %c0_2 = arith.constant 0 : index
    %1 = vector.load %arg4[%c0_1, %c0_2] : memref<1x3xf32, #tpu.memory_space<vmem>>, vector<1x3xf32>
    %2 = vector.broadcast %1 : vector<1x3xf32> to vector<2x3xf32>
    %3 = arith.mulf %0, %2 : vector<2x3xf32>
    %c0_3 = arith.constant 0 : index
    %c0_4 = arith.constant 0 : index
    %4 = vector.load %arg7[%c0_3, %c0_4] : memref<1x3xf32, #tpu.memory_space<vmem>>, vector<1x3xf32>
    %5 = vector.broadcast %4 : vector<1x3xf32> to vector<2x3xf32>
    %6 = arith.addf %3, %5 : vector<2x3xf32>
    %c0_5 = arith.constant 0 : index
    %c0_6 = arith.constant 0 : index
    %7 = vector.load %arg2[%c0_5, %c0_6] : memref<2x5xf32, #tpu.memory_space<vmem>>, vector<2x5xf32>
    %c0_7 = arith.constant 0 : index
    %c0_8 = arith.constant 0 : index
    %8 = vector.load %arg5[%c0_7, %c0_8] : memref<1x5xf32, #tpu.memory_space<vmem>>, vector<1x5xf32>
    %9 = vector.broadcast %8 : vector<1x5xf32> to vector<2x5xf32>
    %10 = arith.mulf %7, %9 : vector<2x5xf32>
    %c0_9 = arith.constant 0 : index
    %c0_10 = arith.constant 0 : index
    %11 = vector.load %arg8[%c0_9, %c0_10] : memref<1x5xf32, #tpu.memory_space<vmem>>, vector<1x5xf32>
    %12 = vector.broadcast %11 : vector<1x5xf32> to vector<2x5xf32>
    %13 = arith.addf %10, %12 : vector<2x5xf32>
    %c0_11 = arith.constant 0 : index
    %c0_12 = arith.constant 0 : index
    %14 = vector.load %arg3[%c0_11, %c0_12] : memref<2x8xf32, #tpu.memory_space<vmem>>, vector<2x8xf32>
    %c0_13 = arith.constant 0 : index
    %c0_14 = arith.constant 0 : index
    %15 = vector.load %arg6[%c0_13, %c0_14] : memref<1x8xf32, #tpu.memory_space<vmem>>, vector<1x8xf32>
    %16 = vector.broadcast %15 : vector<1x8xf32> to vector<2x8xf32>
    %17 = arith.mulf %14, %16 : vector<2x8xf32>
    %c0_15 = arith.constant 0 : index
    %c0_16 = arith.constant 0 : index
    %18 = vector.load %arg9[%c0_15, %c0_16] : memref<1x8xf32, #tpu.memory_space<vmem>>, vector<1x8xf32>
    %19 = vector.broadcast %18 : vector<1x8xf32> to vector<2x8xf32>
    %20 = arith.addf %17, %19 : vector<2x8xf32>
    %21 = tpu.concatenate %6, %13, %20 in 1 : vector<2x3xf32>, vector<2x5xf32>, vector<2x8xf32> -> vector<2x16xf32>
    %c0_17 = arith.constant 0 : index
    %c0_18 = arith.constant 0 : index
    %22 = vector.load %arg10[%c0_17, %c0_18] : memref<2x16xf32, #tpu.memory_space<vmem>>, vector<2x16xf32>
    tpu.vector_store %arg10[%c0_17, %c0_18], %21 {strides = array<i32>} : memref<2x16xf32, #tpu.memory_space<vmem>>, vector<2x16xf32>,
    return
  }
  func.func @transform_0(%arg0: i32) -> (i32, i32) {
    %c0_i32 = arith.constant 0 : i32
    %c0_i32_0 = arith.constant 0 : i32
    return %arg0, %c0_i32 : i32, i32
  }
  func.func @transform_1(%arg0: i32) -> (i32, i32) {
    %c0_i32 = arith.constant 0 : i32
    %c0_i32_0 = arith.constant 0 : i32
    return %arg0, %c0_i32 : i32, i32
  }
  func.func @transform_2(%arg0: i32) -> (i32, i32) {
    %c0_i32 = arith.constant 0 : i32
    %c0_i32_0 = arith.constant 0 : i32
    return %arg0, %c0_i32 : i32, i32
  }
  func.func @transform_3(%arg0: i32) -> (i32, i32) {
    %c0_i32 = arith.constant 0 : i32
    %c0_i32_0 = arith.constant 0 : i32
    %c0_i32_1 = arith.constant 0 : i32
    return %c0_i32, %c0_i32_0 : i32, i32
  }
  func.func @transform_4(%arg0: i32) -> (i32, i32) {
    %c0_i32 = arith.constant 0 : i32
    %c0_i32_0 = arith.constant 0 : i32
    %c0_i32_1 = arith.constant 0 : i32
    return %c0_i32, %c0_i32_0 : i32, i32
  }
  func.func @transform_5(%arg0: i32) -> (i32, i32) {
    %c0_i32 = arith.constant 0 : i32
    %c0_i32_0 = arith.constant 0 : i32
    %c0_i32_1 = arith.constant 0 : i32
    return %c0_i32, %c0_i32_0 : i32, i32
  }
  func.func @transform_6(%arg0: i32) -> (i32, i32) {
    %c0_i32 = arith.constant 0 : i32
    %c0_i32_0 = arith.constant 0 : i32
    %c0_i32_1 = arith.constant 0 : i32
    return %c0_i32, %c0_i32_0 : i32, i32
  }
  func.func @transform_7(%arg0: i32) -> (i32, i32) {
    %c0_i32 = arith.constant 0 : i32
    %c0_i32_0 = arith.constant 0 : i32
    %c0_i32_1 = arith.constant 0 : i32
    return %c0_i32, %c0_i32_0 : i32, i32
  }
  func.func @transform_8(%arg0: i32) -> (i32, i32) {
    %c0_i32 = arith.constant 0 : i32
    %c0_i32_0 = arith.constant 0 : i32
    %c0_i32_1 = arith.constant 0 : i32
    return %c0_i32, %c0_i32_0 : i32, i32
  }
  func.func @transform_9(%arg0: i32) -> (i32, i32) {
    %c0_i32 = arith.constant 0 : i32
    %c0_i32_0 = arith.constant 0 : i32
    return %arg0, %c0_i32 : i32, i32
  }
}

</mosaic_0001>

<llo_original>
// kernel: tpu_custom_call.1
$region0: #{tpu_custom_call.1}
  #allocation0 [shape = 'u32[]', space=smem, size = 0x4, offset = 0x4, fixed_abs, tag = 'smem constant byte address 0x4 - core index']
  #allocation1 [shape = 'u32[144,128]{1,0:T(1,128)}', space=vmem, size = 0x12000, scoped, tag = 'internal scratch']
  %s0 = inlined_call_operand.hbm [shape: f32[2,3], index: 0, kind: input, shape index: {}]
  %s1 = inlined_call_operand.vmem [shape: f32[2,5], index: 1, kind: input, shape index: {}]
  %s2 = inlined_call_operand.vmem [shape: f32[2,8], index: 2, kind: input, shape index: {}]
  %s3 = inlined_call_operand.vmem [shape: f32[1,3], index: 3, kind: input, shape index: {}]
  %s4 = inlined_call_operand.vmem [shape: f32[1,5], index: 4, kind: input, shape index: {}]
  %s5 = inlined_call_operand.vmem [shape: f32[1,8], index: 5, kind: input, shape index: {}]
  %s6 = inlined_call_operand.vmem [shape: f32[1,3], index: 6, kind: input, shape index: {}]
  %s7 = inlined_call_operand.vmem [shape: f32[1,5], index: 7, kind: input, shape index: {}]
  %s8 = inlined_call_operand.vmem [shape: f32[1,8], index: 8, kind: input, shape index: {}]
  %s9 = inlined_call_operand.hbm [shape: f32[2,16], index: 9, kind: output, shape index: {}]
  %s10 = sld [smem:[#allocation0]]
  $region50: #{tpu_custom_call.1} parent=0
    _
  %s12 = ssub.s32 1, %s10
  %s13 = scalar_select 0, %s12, %s10
  $region1: #{tpu_custom_call.1} parent=0
    #allocation2 [shape = 'u8[1024]{0}', space=vmem, size = 0x400, scoped, tag = 'input window, operand 0, single buffered']
    #allocation3 [shape = 's32[1]{0}', space=sflag, size = 0x4, scoped, tag = 'scoped memory for tpu_custom_call.1']
    #allocation4 [shape = 's32[1]{0}', space=sflag, size = 0x4, scoped, tag = 'scoped memory for tpu_custom_call.1']
    #allocation5 [shape = 'u8[1024]{0}', space=vmem, size = 0x400, scoped, tag = 'output window, operand 0, single buffered']
    %14 = vsyncpa [#allocation3], 0
    %15 = vsyncpa [#allocation4], 0
    // Predicated region
    $region2: #{tpu_custom_call.1} parent=1 // pred_check
      _
    $region3: #{tpu_custom_call.1} parent=1 // pred_check_branch
      %17 = sbr.rel (0) target = $region5
    $region4: #{tpu_custom_call.1} parent=1 // pred_region
      %s19 = ssub.s32 32, 32
      %20 = vsyncadd [#allocation3], %s19
      %s22 = sshll.u32 [#allocation2], 4
      %s23 = int_to_ptr.vmem [resolvable:$true] %s22
      %25 = dma.hbm_to_vmem [thread:$0]  %s0, 32, %s23, [#allocation3]
    $region5: #{tpu_custom_call.1} parent=1 // pred_fallthru
      _
    // Predicated region
    $region6: #{tpu_custom_call.1} parent=1 // pred_check
      _
    $region7: #{tpu_custom_call.1} parent=1 // pred_check_branch
      %27 = sbr.rel (0) target = $region9
    $region8: #{tpu_custom_call.1} parent=1 // pred_region
      _
    $region9: #{tpu_custom_call.1} parent=1 // pred_fallthru
      _
    // Predicated region
    $region10: #{tpu_custom_call.1} parent=1 // pred_check
      _
    $region11: #{tpu_custom_call.1} parent=1 // pred_check_branch
      %29 = sbr.rel (0) target = $region13
    $region12: #{tpu_custom_call.1} parent=1 // pred_region
      _
    $region13: #{tpu_custom_call.1} parent=1 // pred_fallthru
      _
    // Predicated region
    $region14: #{tpu_custom_call.1} parent=1 // pred_check
      _
    $region15: #{tpu_custom_call.1} parent=1 // pred_check_branch
      %31 = sbr.rel (0) target = $region17
    $region16: #{tpu_custom_call.1} parent=1 // pred_region
      _
    $region17: #{tpu_custom_call.1} parent=1 // pred_fallthru
      _
    // Predicated region
    $region18: #{tpu_custom_call.1} parent=1 // pred_check
      _
    $region19: #{tpu_custom_call.1} parent=1 // pred_check_branch
      %33 = sbr.rel (0) target = $region21
    $region20: #{tpu_custom_call.1} parent=1 // pred_region
      _
    $region21: #{tpu_custom_call.1} parent=1 // pred_fallthru
      _
    // Predicated region
    $region22: #{tpu_custom_call.1} parent=1 // pred_check
      _
    $region23: #{tpu_custom_call.1} parent=1 // pred_check_branch
      %35 = sbr.rel (0) target = $region25
    $region24: #{tpu_custom_call.1} parent=1 // pred_region
      _
    $region25: #{tpu_custom_call.1} parent=1 // pred_fallthru
      _
    // Predicated region
    $region26: #{tpu_custom_call.1} parent=1 // pred_check
      _
    $region27: #{tpu_custom_call.1} parent=1 // pred_check_branch
      %37 = sbr.rel (0) target = $region29
    $region28: #{tpu_custom_call.1} parent=1 // pred_region
      _
    $region29: #{tpu_custom_call.1} parent=1 // pred_fallthru
      _
    // Predicated region
    $region30: #{tpu_custom_call.1} parent=1 // pred_check
      _
    $region31: #{tpu_custom_call.1} parent=1 // pred_check_branch
      %39 = sbr.rel (0) target = $region33
    $region32: #{tpu_custom_call.1} parent=1 // pred_region
      _
    $region33: #{tpu_custom_call.1} parent=1 // pred_fallthru
      _
    // Predicated region
    $region34: #{tpu_custom_call.1} parent=1 // pred_check
      _
    $region35: #{tpu_custom_call.1} parent=1 // pred_check_branch
      %41 = sbr.rel (0) target = $region37
    $region36: #{tpu_custom_call.1} parent=1 // pred_region
      _
    $region37: #{tpu_custom_call.1} parent=1 // pred_fallthru
      _
    // Predicated region
    $region38: #{tpu_custom_call.1} parent=1 // pred_check
      _
    $region39: #{tpu_custom_call.1} parent=1 // pred_check_branch
      %43 = sbr.rel (0) target = $region41
    $region40: #{tpu_custom_call.1} parent=1 // pred_region
      %44 = dma.done [#allocation3], 32
    $region41: #{tpu_custom_call.1} parent=1 // pred_fallthru
      _
    %v45 = vld [vmem:[#allocation2] sm:$0x3]
    %v46 = vld [vmem:[%s3] sm:$0x1]
    %v48 = vlaneseq
    %v49 = vshrl.u32 %v48, 7
    %v50 = vsub.s32 0, %v49
    %v51 = vrot.slane %v46, %v50
    %v53 = vmul.f32 %v45, %v51
    %v54 = vld [vmem:[%s6] sm:$0x1]
    %v56 = vlaneseq
    %v57 = vshrl.u32 %v56, 7
    %v58 = vsub.s32 0, %v57
    %v59 = vrot.slane %v54, %v58
    %v61 = vadd.f32 %v53, %v59
    %v62 = vld [vmem:[%s1] sm:$0x3]
    %v63 = vld [vmem:[%s4] sm:$0x1]
    %v65 = vlaneseq
    %v66 = vshrl.u32 %v65, 7
    %v67 = vsub.s32 0, %v66
    %v68 = vrot.slane %v63, %v67
    %v70 = vmul.f32 %v62, %v68
    %v71 = vld [vmem:[%s7] sm:$0x1]
    %v73 = vlaneseq
    %v74 = vshrl.u32 %v73, 7
    %v75 = vsub.s32 0, %v74
    %v76 = vrot.slane %v71, %v75
    %v78 = vadd.f32 %v70, %v76
    %v79 = vld [vmem:[%s2] sm:$0x3]
    %v80 = vld [vmem:[%s5] sm:$0x1]
    %v82 = vlaneseq
    %v83 = vshrl.u32 %v82, 7
    %v84 = vsub.s32 0, %v83
    %v85 = vrot.slane %v80, %v84
    %v87 = vmul.f32 %v79, %v85
    %v88 = vld [vmem:[%s8] sm:$0x1]
    %v90 = vlaneseq
    %v91 = vshrl.u32 %v90, 7
    %v92 = vsub.s32 0, %v91
    %v93 = vrot.slane %v88, %v92
    %v95 = vadd.f32 %v87, %v93
    %97 = vrot.lane.b32.xlu0 %v78, 3
    %v98 = vpop.permute.xlu0 %97
    %101 = vrot.lane.b32.xlu0 %v95, 8
    %v102 = vpop.permute.xlu0 %101
    %vm104 = vcmask 23552
    %v105 = vsel %vm104, %v61, %v98
    %vm106 = vcmask 64512
    %v107 = vsel %vm106, %v105, %v102
    %vm108 = vcmask 123904
    %109 = vst.msk [vmem:[#allocation5] sm:$0x3] %vm108, %v107
    // Predicated region
    $region42: #{tpu_custom_call.1} parent=1 // pred_check
      _
    $region43: #{tpu_custom_call.1} parent=1 // pred_check_branch
      %111 = sbr.rel (0) target = $region45
    $region44: #{tpu_custom_call.1} parent=1 // pred_region
      %s113 = ssub.s32 32, 32
      %114 = vsyncadd [#allocation4], %s113
      %s116 = sshll.u32 [#allocation5], 4
      %s117 = int_to_ptr.vmem [resolvable:$true] %s116
      %119 = dma.vmem_to_hbm [thread:$0]  %s117, 32, %s9, [#allocation4]
    $region45: #{tpu_custom_call.1} parent=1 // pred_fallthru
      _
    // Predicated region
    $region46: #{tpu_custom_call.1} parent=1 // pred_check
      _
    $region47: #{tpu_custom_call.1} parent=1 // pred_check_branch
      %121 = sbr.rel (0) target = $region49
    $region48: #{tpu_custom_call.1} parent=1 // pred_region
      %122 = dma.done [#allocation4], 32
    $region49: #{tpu_custom_call.1} parent=1 // pred_fallthru
      _
    %123 = vsyncpa [#allocation3], 1
    %124 = vsyncpa [#allocation4], 1

</llo_original>
